<compile_context>
chip_gen: v7x
topology: tpu7x:2x2x1
jax: 0.10.0
libtpu: 0.0.40
codegen_flags: <defaults>
</compile_context>

<pallas_src>
import functools

import jax
import jax.numpy as jnp
from jax.experimental import pallas as pl
from jax.experimental.pallas import tpu as pltpu

LEAK = 0.1                         # LeakyReLU negative slope
BN_EPS = 1e-5                      # nn.BatchNorm2d default eps
LANE = 128                         # lane width: pad channel dims to this
TILE_M = 512                       # rows per grid step for 1x1 / tail kernels
VMEM_LIMIT = 48 * 1024 * 1024      # fits v7x's 64 MiB physical VMEM w/ headroom
COMPUTE_DTYPE = jnp.bfloat16       # matmul-input / activation storage dtype


def _leaky(y):
    return jnp.where(y > 0, y, LEAK * y)


def _round_up(x, m):
    return ((x + m - 1) // m) * m


def _compiler_params():
    return pltpu.CompilerParams(dimension_semantics=("parallel",),
                                vmem_limit_bytes=VMEM_LIMIT)


# --------------------------- Pallas kernels ---------------------------------

def _pw_conv_kernel(x_ref, w_ref, s_ref, b_ref, o_ref, *, act):
    # Fused 1x1 conv (matmul) + folded-BN affine + optional LeakyReLU.
    # x: (TM, Cin) bf16, w: (Cin, Cout) bf16, s/b: (1, Cout) f32.
    y = jnp.dot(x_ref[...], w_ref[...], preferred_element_type=jnp.float32)
    y = y * s_ref[...] + b_ref[...]
    if act:
        y = _leaky(y)
    o_ref[...] = y.astype(o_ref.dtype)


def _bottleneck_kernel(x_ref, w1_ref, s1_ref, b1_ref, w2_ref, s2_ref, b2_ref,
                       o_ref, *, H, W, add):
    # One full Bottleneck per grid step (one image):
    #   h = LeakyReLU(BN(x @ w1))                 (1x1 conv, stays in VMEM)
    #   y = LeakyReLU(BN(conv3x3(h))) [+ x]       (3x3 same conv + shortcut)
    # x_ref/o_ref: (1, H*W, C);  w1: (C, C);  w2: (3, 3*C, C);  s/b: (1, C).
    C = o_ref.shape[-1]
    M = H * W
    x2 = x_ref[0]                                               # (M, C) bf16

    h = jnp.dot(x2, w1_ref[...], preferred_element_type=jnp.float32)
    h = _leaky(h * s1_ref[...] + b1_ref[...]).astype(x2.dtype)
    hs = h.reshape(H, W, C)

    # In-kernel zero padding / shifting (no host-side jnp.pad, no HBM pass).
    zcol = jnp.zeros((H, 1, C), hs.dtype)
    zrow = jnp.zeros((1, W + 2, C), hs.dtype)
    wide = jnp.concatenate([zcol, hs, zcol], axis=1)            # (H, W+2, C)
    rows = [jnp.concatenate([zrow, wide[:H - 1]], axis=0),      # row h-1
            wide,                                               # row h
            jnp.concatenate([wide[1:], zrow], axis=0)]          # row h+1

    # Three fat-contraction matmuls (K = 3*C), one per kernel row.
    acc = jnp.zeros((M, C), jnp.float32)
    for ky in range(3):
        r = rows[ky]
        slab = jnp.concatenate(
            [r[:, 0:W, :], r[:, 1:W + 1, :], r[:, 2:W + 2, :]], axis=-1)
        acc = acc + jnp.dot(slab.reshape(M, 3 * C), w2_ref[ky],
                            preferred_element_type=jnp.float32)

    y = _leaky(acc * s2_ref[...] + b2_ref[...])
    if add:
        y = y + x2.astype(jnp.float32)                          # shortcut
    o_ref[0] = y.astype(o_ref.dtype)


def _csp_tail_kernel(cur_ref, x_ref, w3_ref, w2_ref, ps1_ref, pb1_ref,
                     ps2_ref, pb2_ref, w4a_ref, w4b_ref, s4_ref, b4_ref,
                     o_ref):
    # Fused:  y1 = cur @ cv3 ,  y2 = x @ cv2        (plain 1x1 convs)
    #         z  = LeakyReLU(BN(cat(y1, y2)))       (split halves, no concat)
    #         o  = LeakyReLU(BN(z @ cv4))           (cv4 split row-wise)
    y1 = jnp.dot(cur_ref[...], w3_ref[...], preferred_element_type=jnp.float32)
    y2 = jnp.dot(x_ref[...], w2_ref[...], preferred_element_type=jnp.float32)
    z1 = _leaky(y1 * ps1_ref[...] + pb1_ref[...]).astype(w4a_ref.dtype)
    z2 = _leaky(y2 * ps2_ref[...] + pb2_ref[...]).astype(w4b_ref.dtype)
    y = (jnp.dot(z1, w4a_ref[...], preferred_element_type=jnp.float32)
         + jnp.dot(z2, w4b_ref[...], preferred_element_type=jnp.float32))
    y = _leaky(y * s4_ref[...] + b4_ref[...])
    o_ref[...] = y.astype(o_ref.dtype)


# --------------------------- pallas_call wrappers ----------------------------

def _row(v):
    return v.reshape(1, -1).astype(jnp.float32)


def pw_conv(x, w, scale, bias, act, out_dtype=COMPUTE_DTYPE):
    M, cin = x.shape
    cout = w.shape[1]
    tm = min(TILE_M, _round_up(M, 8))
    return pl.pallas_call(
        functools.partial(_pw_conv_kernel, act=act),
        out_shape=jax.ShapeDtypeStruct((M, cout), out_dtype),
        grid=(pl.cdiv(M, tm),),
        in_specs=[
            pl.BlockSpec((tm, cin), lambda i: (i, 0)),
            pl.BlockSpec((cin, cout), lambda i: (0, 0)),
            pl.BlockSpec((1, cout), lambda i: (0, 0)),
            pl.BlockSpec((1, cout), lambda i: (0, 0)),
        ],
        out_specs=pl.BlockSpec((tm, cout), lambda i: (i, 0)),
        compiler_params=_compiler_params(),
    )(x, w, _row(scale), _row(bias))


def bottleneck_block(cur, w1, s1, b1, w2, s2, b2, *, N, H, W, add):
    C = cur.shape[-1]
    cur3 = cur.reshape(N, H * W, C)
    out = pl.pallas_call(
        functools.partial(_bottleneck_kernel, H=H, W=W, add=add),
        out_shape=jax.ShapeDtypeStruct((N, H * W, C), COMPUTE_DTYPE),
        grid=(N,),
        in_specs=[
            pl.BlockSpec((1, H * W, C), lambda b: (b, 0, 0)),
            pl.BlockSpec((C, C), lambda b: (0, 0)),
            pl.BlockSpec((1, C), lambda b: (0, 0)),
            pl.BlockSpec((1, C), lambda b: (0, 0)),
            pl.BlockSpec((3, 3 * C, C), lambda b: (0, 0, 0)),
            pl.BlockSpec((1, C), lambda b: (0, 0)),
            pl.BlockSpec((1, C), lambda b: (0, 0)),
        ],
        out_specs=pl.BlockSpec((1, H * W, C), lambda b: (b, 0, 0)),
        compiler_params=_compiler_params(),
    )(cur3, w1, _row(s1), _row(b1), w2, _row(s2), _row(b2))
    return out.reshape(N * H * W, C)


def csp_tail(cur, xf, w3, w2, ps1, pb1, ps2, pb2, w4a, w4b, s4, b4):
    M, cp = cur.shape
    c1p = xf.shape[1]
    c2p = w4a.shape[1]
    tm = min(TILE_M, _round_up(M, 8))
    row = lambda i: (i, 0)
    full = lambda i: (0, 0)
    return pl.pallas_call(
        _csp_tail_kernel,
        out_shape=jax.ShapeDtypeStruct((M, c2p), jnp.float32),
        grid=(pl.cdiv(M, tm),),
        in_specs=[
            pl.BlockSpec((tm, cp), row),
            pl.BlockSpec((tm, c1p), row),
            pl.BlockSpec((cp, cp), full),
            pl.BlockSpec((c1p, cp), full),
            pl.BlockSpec((1, cp), full),
            pl.BlockSpec((1, cp), full),
            pl.BlockSpec((1, cp), full),
            pl.BlockSpec((1, cp), full),
            pl.BlockSpec((cp, c2p), full),
            pl.BlockSpec((cp, c2p), full),
            pl.BlockSpec((1, c2p), full),
            pl.BlockSpec((1, c2p), full),
        ],
        out_specs=pl.BlockSpec((tm, c2p), row),
        compiler_params=_compiler_params(),
    )(cur, xf, w3, w2, _row(ps1), _row(pb1), _row(ps2), _row(pb2),
      w4a, w4b, _row(s4), _row(b4))


# --------------------------- parameters & forward ----------------------------

def bn_fold(bn):
    gamma, beta, mean, var = bn
    s = gamma / jnp.sqrt(var + BN_EPS)
    return s, beta - mean * s


def init_params(key, c1, c2, n=1, e=0.5):
    c_ = int(c2 * e)
    keys = iter(jax.random.split(key, 16 + 10 * n))

    def conv_w(cin, cout, k=1):
        fan = cin * k * k
        shape = (cin, cout) if k == 1 else (k, k, cin, cout)
        return jax.random.normal(next(keys), shape, jnp.float32) / jnp.sqrt(fan)

    def bn_p(c):
        gamma = 1.0 + 0.1 * jax.random.normal(next(keys), (c,), jnp.float32)
        beta = 0.1 * jax.random.normal(next(keys), (c,), jnp.float32)
        mean = 0.1 * jax.random.normal(next(keys), (c,), jnp.float32)
        var = 1.0 + 0.1 * jax.random.uniform(next(keys), (c,), jnp.float32)
        return (gamma, beta, mean, var)

    p = {
        'cv1_w': conv_w(c1, c_), 'cv1_bn': bn_p(c_),
        'cv2_w': conv_w(c1, c_),                 # plain conv, no BN/act
        'cv3_w': conv_w(c_, c_),                 # plain conv, no BN/act
        'cv4_w': conv_w(2 * c_, c2), 'cv4_bn': bn_p(c2),
        'bn': bn_p(2 * c_),
        'm': [],
    }
    for _ in range(n):
        p['m'].append({
            'cv1_w': conv_w(c_, c_), 'cv1_bn': bn_p(c_),     # e=1.0 inside block
            'cv2_w': conv_w(c_, c_, 3), 'cv2_bn': bn_p(c_),
        })
    return p


def _pad2(w, r, c):
    return jnp.pad(w, ((0, r - w.shape[0]), (0, c - w.shape[1])))


def _pad1(v, n):
    return jnp.pad(v, (0, n - v.shape[0]))


def bottleneck_csp_pallas(x_nchw, p, shortcut=True):
    x = jnp.transpose(x_nchw, (0, 2, 3, 1))                  # NCHW -> NHWC
    N, H, W, c1 = x.shape
    M = N * H * W
    c_ = p['cv1_w'].shape[1]
    c2 = p['cv4_w'].shape[1]
    c1p, c_p, c2p = (_round_up(c, LANE) for c in (c1, c_, c2))

    # Channel-pad input once (zeros) and cast matmul inputs to bf16.
    xf = _pad2(x.reshape(M, c1), M, c1p).astype(COMPUTE_DTYPE)

    # cv1: Conv = 1x1 conv + BN + LeakyReLU (tiled over M, parallel grid)
    s1, b1 = bn_fold(p['cv1_bn'])
    cur = pw_conv(xf, _pad2(p['cv1_w'], c1p, c_p).astype(COMPUTE_DTYPE),
                  _pad1(s1, c_p), _pad1(b1, c_p), act=True)

    # m: n fused Bottleneck blocks (1x1 + 3x3 + shortcut, one kernel each)
    for blk in p['m']:
        sb1, bb1 = bn_fold(blk['cv1_bn'])
        sb2, bb2 = bn_fold(blk['cv2_bn'])
        w2 = jnp.pad(blk['cv2_w'],
                     ((0, 0), (0, 0), (0, c_p - c_), (0, c_p - c_)))
        w2 = w2.reshape(3, 3 * c_p, c_p).astype(COMPUTE_DTYPE)
        cur = bottleneck_block(
            cur, _pad2(blk['cv1_w'], c_p, c_p).astype(COMPUTE_DTYPE),
            _pad1(sb1, c_p), _pad1(bb1, c_p),
            w2, _pad1(sb2, c_p), _pad1(bb2, c_p),
            N=N, H=H, W=W, add=shortcut)

    # tail: cv3(cur), cv2(x), cat -> BN -> LeakyReLU -> cv4, all fused
    ps, pb = bn_fold(p['bn'])
    s4, b4 = bn_fold(p['cv4_bn'])
    out = csp_tail(
        cur, xf,
        _pad2(p['cv3_w'], c_p, c_p).astype(COMPUTE_DTYPE),
        _pad2(p['cv2_w'], c1p, c_p).astype(COMPUTE_DTYPE),
        _pad1(ps[:c_], c_p), _pad1(pb[:c_], c_p),
        _pad1(ps[c_:], c_p), _pad1(pb[c_:], c_p),
        _pad2(p['cv4_w'][:c_], c_p, c2p).astype(COMPUTE_DTYPE),
        _pad2(p['cv4_w'][c_:], c_p, c2p).astype(COMPUTE_DTYPE),
        _pad1(s4, c2p), _pad1(b4, c2p))

    out = out[:, :c2].reshape(N, H, W, c2)
    return jnp.transpose(out, (0, 3, 1, 2))                  # NHWC -> NCHW


# --------------------------- pure-JAX reference ------------------------------

def bottleneck_csp_ref(x_nchw, p, shortcut=True):
    x = jnp.transpose(x_nchw, (0, 2, 3, 1))

    def conv1x1(t, w):
        return jnp.einsum('nhwc,co->nhwo', t, w)

    def bn_act(t, bn, act=True):
        s, b = bn_fold(bn)
        t = t * s + b
        return _leaky(t) if act else t

    cur = bn_act(conv1x1(x, p['cv1_w']), p['cv1_bn'])
    for blk in p['m']:
        h = bn_act(conv1x1(cur, blk['cv1_w']), blk['cv1_bn'])
        h = jax.lax.conv_general_dilated(
            h, blk['cv2_w'], window_strides=(1, 1), padding=((1, 1), (1, 1)),
            dimension_numbers=('NHWC', 'HWIO', 'NHWC'))
        h = bn_act(h, blk['cv2_bn'])
        cur = cur + h if shortcut else h
    y1 = conv1x1(cur, p['cv3_w'])
    y2 = conv1x1(x, p['cv2_w'])
    z = bn_act(jnp.concatenate([y1, y2], axis=-1), p['bn'])
    out = bn_act(conv1x1(z, p['cv4_w']), p['cv4_bn'])
    return jnp.transpose(out, (0, 3, 1, 2))


# ------------------------------------ main -----------------------------------

if __name__ == "__main__":
    c1, c2, n = 4, 4, 1
    N, H, W = 2, 16, 16

    x = jax.random.normal(jax.random.PRNGKey(0), (N, c1, H, W), jnp.float32)
    params = init_params(jax.random.PRNGKey(42), c1, c2, n=n)

    out = jax.block_until_ready(bottleneck_csp_pallas(x, params))
    ref = bottleneck_csp_ref(x, params)

    assert out.shape == (N, c2, H, W), out.shape
    err = float(jnp.max(jnp.abs(out - ref)))
    # Tolerance sized for bf16 matmul inputs / bf16 intermediates vs f32 ref.
    assert jnp.allclose(out, ref, atol=1e-1, rtol=1e-1), err
    assert bool(jnp.all(jnp.isfinite(out)))
    print("KERNEL_OK")
</pallas_src>

<mosaic_0001>
module attributes {stable_mosaic.version = 11 : i64} {
  func.func @_pw_conv_kernel(%arg0: i32, %arg1: memref<512x128xbf16, #tpu.memory_space<vmem>>, %arg2: memref<128x128xbf16, #tpu.memory_space<vmem>>, %arg3: memref<1x128xf32, #tpu.memory_space<vmem>>, %arg4: memref<1x128xf32, #tpu.memory_space<vmem>>, %arg5: memref<512x128xbf16, #tpu.memory_space<vmem>>) attributes {dimension_semantics = [#tpu.dimension_semantics<parallel>], iteration_bounds = array<i64: 1>, scalar_prefetch = 0 : i64, scratch_operands = 0 : i64, tpu.core_type = #tpu.core_type<tc>, window_params = [{transform_indices = @transform_0, window_bounds = array<i64: 512, 128>}, {pipeline_mode = #tpu.pipeline_mode<synchronous>, transform_indices = @transform_1, window_bounds = array<i64: 128, 128>}, {pipeline_mode = #tpu.pipeline_mode<synchronous>, transform_indices = @transform_2, window_bounds = array<i64: 1, 128>}, {pipeline_mode = #tpu.pipeline_mode<synchronous>, transform_indices = @transform_3, window_bounds = array<i64: 1, 128>}, {transform_indices = @transform_4, window_bounds = array<i64: 512, 128>}]} {
    %c0 = arith.constant 0 : index
    %c0_0 = arith.constant 0 : index
    %0 = vector.load %arg1[%c0, %c0_0] : memref<512x128xbf16, #tpu.memory_space<vmem>>, vector<512x128xbf16>
    %c0_1 = arith.constant 0 : index
    %c0_2 = arith.constant 0 : index
    %1 = vector.load %arg2[%c0_1, %c0_2] : memref<128x128xbf16, #tpu.memory_space<vmem>>, vector<128x128xbf16>
    %cst = arith.constant dense<0.000000e+00> : vector<512x128xf32>
    %2 = tpu.matmul %0, %1, %cst {dimension_numbers = #tpu.dot_dimension_numbers<[1], [0], [0], [1], [0, 0, 1, 1], [], []>} : vector<512x128xbf16>, vector<128x128xbf16>, vector<512x128xf32> -> vector<512x128xf32>
    %c0_3 = arith.constant 0 : index
    %c0_4 = arith.constant 0 : index
    %3 = vector.load %arg3[%c0_3, %c0_4] : memref<1x128xf32, #tpu.memory_space<vmem>>, vector<1x128xf32>
    %4 = vector.broadcast %3 : vector<1x128xf32> to vector<512x128xf32>
    %5 = arith.mulf %2, %4 : vector<512x128xf32>
    %c0_5 = arith.constant 0 : index
    %c0_6 = arith.constant 0 : index
    %6 = vector.load %arg4[%c0_5, %c0_6] : memref<1x128xf32, #tpu.memory_space<vmem>>, vector<1x128xf32>
    %7 = vector.broadcast %6 : vector<1x128xf32> to vector<512x128xf32>
    %8 = arith.addf %5, %7 : vector<512x128xf32>
    %cst_7 = arith.constant 0.000000e+00 : f32
    %9 = vector.broadcast %cst_7 : f32 to vector<512x128xf32>
    %10 = arith.cmpf ogt, %8, %9 : vector<512x128xf32>
    %cst_8 = arith.constant 1.000000e-01 : f32
    %11 = vector.broadcast %cst_8 : f32 to vector<512x128xf32>
    %12 = arith.mulf %11, %8 : vector<512x128xf32>
    %13 = arith.select %10, %8, %12 : vector<512x128xi1>, vector<512x128xf32>
    %14 = arith.truncf %13 : vector<512x128xf32> to vector<512x128xbf16>
    %c0_9 = arith.constant 0 : index
    %c0_10 = arith.constant 0 : index
    %15 = vector.load %arg5[%c0_9, %c0_10] : memref<512x128xbf16, #tpu.memory_space<vmem>>, vector<512x128xbf16>
    tpu.vector_store %arg5[%c0_9, %c0_10], %14 {strides = array<i32>} : memref<512x128xbf16, #tpu.memory_space<vmem>>, vector<512x128xbf16>,
    return
  }
  func.func @transform_0(%arg0: i32) -> (i32, i32) {
    %c0_i32 = arith.constant 0 : i32
    %c0_i32_0 = arith.constant 0 : i32
    return %arg0, %c0_i32 : i32, i32
  }
  func.func @transform_1(%arg0: i32) -> (i32, i32) {
    %c0_i32 = arith.constant 0 : i32
    %c0_i32_0 = arith.constant 0 : i32
    %c0_i32_1 = arith.constant 0 : i32
    return %c0_i32, %c0_i32_0 : i32, i32
  }
  func.func @transform_2(%arg0: i32) -> (i32, i32) {
    %c0_i32 = arith.constant 0 : i32
    %c0_i32_0 = arith.constant 0 : i32
    %c0_i32_1 = arith.constant 0 : i32
    return %c0_i32, %c0_i32_0 : i32, i32
  }
  func.func @transform_3(%arg0: i32) -> (i32, i32) {
    %c0_i32 = arith.constant 0 : i32
    %c0_i32_0 = arith.constant 0 : i32
    %c0_i32_1 = arith.constant 0 : i32
    return %c0_i32, %c0_i32_0 : i32, i32
  }
  func.func @transform_4(%arg0: i32) -> (i32, i32) {
    %c0_i32 = arith.constant 0 : i32
    %c0_i32_0 = arith.constant 0 : i32
    return %arg0, %c0_i32 : i32, i32
  }
}

</mosaic_0001>

<llo_original>
// kernel: tpu_custom_call.1
$region0: #{tpu_custom_call.1}
  #allocation0 [shape = 'u32[]', space=smem, size = 0x4, offset = 0x4, fixed_abs, tag = 'smem constant byte address 0x4 - core index']
  #allocation1 [shape = 'u32[144,128]{1,0:T(1,128)}', space=vmem, size = 0x12000, scoped, tag = 'internal scratch']
  %s0 = inlined_call_operand.hbm [shape: bf16[512,128], index: 0, kind: input, shape index: {}]
  %s1 = inlined_call_operand.hbm [shape: bf16[128,128], index: 1, kind: input, shape index: {}]
  %s2 = inlined_call_operand.vmem [shape: f32[1,128], index: 2, kind: input, shape index: {}]
  %s3 = inlined_call_operand.vmem [shape: f32[1,128], index: 3, kind: input, shape index: {}]
  %s4 = inlined_call_operand.hbm [shape: bf16[512,128], index: 4, kind: output, shape index: {}]
  %s5 = sld [smem:[#allocation0]]
  $region34: #{tpu_custom_call.1} parent=0
    _
  %s7 = ssub.s32 1, %s5
  %s8 = scalar_select 0, %s7, %s5
  $region1: #{tpu_custom_call.1} parent=0
    #allocation2 [shape = 'u8[131072]{0}', space=vmem, size = 0x20000, scoped, tag = 'input window, operand 0, single buffered']
    #allocation3 [shape = 's32[1]{0}', space=sflag, size = 0x4, scoped, tag = 'scoped memory for tpu_custom_call.1']
    #allocation4 [shape = 's32[1]{0}', space=sflag, size = 0x4, scoped, tag = 'scoped memory for tpu_custom_call.1']
    #allocation5 [shape = 'u8[32768]{0}', space=vmem, size = 0x8000, scoped, tag = 'input window, operand 1, single buffered']
    #allocation6 [shape = 's32[1]{0}', space=sflag, size = 0x4, scoped, tag = 'scoped memory for tpu_custom_call.1']
    #allocation7 [shape = 'u8[131072]{0}', space=vmem, size = 0x20000, scoped, tag = 'output window, operand 0, single buffered']
    %9 = vsyncpa [#allocation3], 0
    %10 = vsyncpa [#allocation6], 0
    %11 = vsyncpa [#allocation4], 0
    // Predicated region
    $region2: #{tpu_custom_call.1} parent=1 // pred_check
      _
    $region3: #{tpu_custom_call.1} parent=1 // pred_check_branch
      %13 = sbr.rel (0) target = $region5
    $region4: #{tpu_custom_call.1} parent=1 // pred_region
      %s15 = ssub.s32 4096, 4096
      %16 = vsyncadd [#allocation3], %s15
      %s17 = sshll.u32 [#allocation2], 4
      %s18 = int_to_ptr.vmem [resolvable:$true] %s17
      %23 = dma.hbm_to_vmem [thread:$0]  %s0, 4096, %s18, [#allocation3], 64, 64, 4
    $region5: #{tpu_custom_call.1} parent=1 // pred_fallthru
      _
    // Predicated region
    $region6: #{tpu_custom_call.1} parent=1 // pred_check
      _
    $region7: #{tpu_custom_call.1} parent=1 // pred_check_branch
      %25 = sbr.rel (0) target = $region9
    $region8: #{tpu_custom_call.1} parent=1 // pred_region
      %s27 = ssub.s32 1024, 1024
      %28 = vsyncadd [#allocation6], %s27
      %s29 = sshll.u32 [#allocation5], 4
      %s30 = int_to_ptr.vmem [resolvable:$true] %s29
      %35 = dma.hbm_to_vmem [thread:$0]  %s1, 1024, %s30, [#allocation6], 64, 64, 4
    $region9: #{tpu_custom_call.1} parent=1 // pred_fallthru
      _
    // Predicated region
    $region10: #{tpu_custom_call.1} parent=1 // pred_check
      _
    $region11: #{tpu_custom_call.1} parent=1 // pred_check_branch
      %37 = sbr.rel (0) target = $region13
    $region12: #{tpu_custom_call.1} parent=1 // pred_region
      _
    $region13: #{tpu_custom_call.1} parent=1 // pred_fallthru
      _
    // Predicated region
    $region14: #{tpu_custom_call.1} parent=1 // pred_check
      _
    $region15: #{tpu_custom_call.1} parent=1 // pred_check_branch
      %39 = sbr.rel (0) target = $region17
    $region16: #{tpu_custom_call.1} parent=1 // pred_region
      _
    $region17: #{tpu_custom_call.1} parent=1 // pred_fallthru
      _
    // Predicated region
    $region18: #{tpu_custom_call.1} parent=1 // pred_check
      _
    $region19: #{tpu_custom_call.1} parent=1 // pred_check_branch
      %41 = sbr.rel (0) target = $region21
    $region20: #{tpu_custom_call.1} parent=1 // pred_region
      %42 = dma.done [#allocation3], 4096
    $region21: #{tpu_custom_call.1} parent=1 // pred_fallthru
      _
    // Predicated region
    $region22: #{tpu_custom_call.1} parent=1 // pred_check
      _
    $region23: #{tpu_custom_call.1} parent=1 // pred_check_branch
      %44 = sbr.rel (0) target = $region25
    $region24: #{tpu_custom_call.1} parent=1 // pred_region
      %45 = dma.done [#allocation6], 1024
    $region25: #{tpu_custom_call.1} parent=1 // pred_fallthru
      _
    %v47 = vld [vmem:[#allocation2] sm:$0xf]
    %v48 = vld [vmem:[#allocation2 + $0x4] sm:$0xf]
    %v49 = vld [vmem:[#allocation2 + $0x8] sm:$0xf]
    %v50 = vld [vmem:[#allocation2 + $0xc] sm:$0xf]
    %v51 = vld [vmem:[#allocation2 + $0x10] sm:$0xf]
    %v52 = vld [vmem:[#allocation2 + $0x14] sm:$0xf]
    %v53 = vld [vmem:[#allocation2 + $0x18] sm:$0xf]
    %v54 = vld [vmem:[#allocation2 + $0x1c] sm:$0xf]
    %v55 = vld [vmem:[#allocation2 + $0x20] sm:$0xf]
    %v56 = vld [vmem:[#allocation2 + $0x24] sm:$0xf]
    %v57 = vld [vmem:[#allocation2 + $0x28] sm:$0xf]
    %v58 = vld [vmem:[#allocation2 + $0x2c] sm:$0xf]
    %v59 = vld [vmem:[#allocation2 + $0x30] sm:$0xf]
    %v60 = vld [vmem:[#allocation2 + $0x34] sm:$0xf]
    %v61 = vld [vmem:[#allocation2 + $0x38] sm:$0xf]
    %v62 = vld [vmem:[#allocation2 + $0x3c] sm:$0xf]
    %v63 = vld [vmem:[#allocation2 + $0x40] sm:$0xf]
    %v64 = vld [vmem:[#allocation2 + $0x44] sm:$0xf]
    %v65 = vld [vmem:[#allocation2 + $0x48] sm:$0xf]
    %v66 = vld [vmem:[#allocation2 + $0x4c] sm:$0xf]
    %v67 = vld [vmem:[#allocation2 + $0x50] sm:$0xf]
    %v68 = vld [vmem:[#allocation2 + $0x54] sm:$0xf]
    %v69 = vld [vmem:[#allocation2 + $0x58] sm:$0xf]
    %v70 = vld [vmem:[#allocation2 + $0x5c] sm:$0xf]
    %v71 = vld [vmem:[#allocation2 + $0x60] sm:$0xf]
    %v72 = vld [vmem:[#allocation2 + $0x64] sm:$0xf]
    %v73 = vld [vmem:[#allocation2 + $0x68] sm:$0xf]
    %v74 = vld [vmem:[#allocation2 + $0x6c] sm:$0xf]
    %v75 = vld [vmem:[#allocation2 + $0x70] sm:$0xf]
    %v76 = vld [vmem:[#allocation2 + $0x74] sm:$0xf]
    %v77 = vld [vmem:[#allocation2 + $0x78] sm:$0xf]
    %v78 = vld [vmem:[#allocation2 + $0x7c] sm:$0xf]
    %v79 = vld [vmem:[#allocation2 + $0x80] sm:$0xf]
    %v80 = vld [vmem:[#allocation2 + $0x84] sm:$0xf]
    %v81 = vld [vmem:[#allocation2 + $0x88] sm:$0xf]
    %v82 = vld [vmem:[#allocation2 + $0x8c] sm:$0xf]
    %v83 = vld [vmem:[#allocation2 + $0x90] sm:$0xf]
    %v84 = vld [vmem:[#allocation2 + $0x94] sm:$0xf]
    %v85 = vld [vmem:[#allocation2 + $0x98] sm:$0xf]
    %v86 = vld [vmem:[#allocation2 + $0x9c] sm:$0xf]
    %v87 = vld [vmem:[#allocation2 + $0xa0] sm:$0xf]
    %v88 = vld [vmem:[#allocation2 + $0xa4] sm:$0xf]
    %v89 = vld [vmem:[#allocation2 + $0xa8] sm:$0xf]
    %v90 = vld [vmem:[#allocation2 + $0xac] sm:$0xf]
    %v91 = vld [vmem:[#allocation2 + $0xb0] sm:$0xf]
    %v92 = vld [vmem:[#allocation2 + $0xb4] sm:$0xf]
    %v93 = vld [vmem:[#allocation2 + $0xb8] sm:$0xf]
    %v94 = vld [vmem:[#allocation2 + $0xbc] sm:$0xf]
    %v95 = vld [vmem:[#allocation2 + $0xc0] sm:$0xf]
    %v96 = vld [vmem:[#allocation2 + $0xc4] sm:$0xf]
    %v97 = vld [vmem:[#allocation2 + $0xc8] sm:$0xf]
    %v98 = vld [vmem:[#allocation2 + $0xcc] sm:$0xf]
    %v99 = vld [vmem:[#allocation2 + $0xd0] sm:$0xf]
    %v100 = vld [vmem:[#allocation2 + $0xd4] sm:$0xf]
    %v101 = vld [vmem:[#allocation2 + $0xd8] sm:$0xf]
    %v102 = vld [vmem:[#allocation2 + $0xdc] sm:$0xf]
    %v103 = vld [vmem:[#allocation2 + $0xe0] sm:$0xf]
    %v104 = vld [vmem:[#allocation2 + $0xe4] sm:$0xf]
    %v105 = vld [vmem:[#allocation2 + $0xe8] sm:$0xf]
    %v106 = vld [vmem:[#allocation2 + $0xec] sm:$0xf]
    %v107 = vld [vmem:[#allocation2 + $0xf0] sm:$0xf]
    %v108 = vld [vmem:[#allocation2 + $0xf4] sm:$0xf]
    %v109 = vld [vmem:[#allocation2 + $0xf8] sm:$0xf]
    %v110 = vld [vmem:[#allocation2 + $0xfc] sm:$0xf]
    %v111 = vld [vmem:[#allocation5] sm:$0xf]
    %v112 = vld [vmem:[#allocation5 + $0x4] sm:$0xf]
    %v113 = vld [vmem:[#allocation5 + $0x8] sm:$0xf]
    %v114 = vld [vmem:[#allocation5 + $0xc] sm:$0xf]
    %v115 = vld [vmem:[#allocation5 + $0x10] sm:$0xf]
    %v116 = vld [vmem:[#allocation5 + $0x14] sm:$0xf]
    %v117 = vld [vmem:[#allocation5 + $0x18] sm:$0xf]
    %v118 = vld [vmem:[#allocation5 + $0x1c] sm:$0xf]
    %v119 = vld [vmem:[#allocation5 + $0x20] sm:$0xf]
    %v120 = vld [vmem:[#allocation5 + $0x24] sm:$0xf]
    %v121 = vld [vmem:[#allocation5 + $0x28] sm:$0xf]
    %v122 = vld [vmem:[#allocation5 + $0x2c] sm:$0xf]
    %v123 = vld [vmem:[#allocation5 + $0x30] sm:$0xf]
    %v124 = vld [vmem:[#allocation5 + $0x34] sm:$0xf]
    %v125 = vld [vmem:[#allocation5 + $0x38] sm:$0xf]
    %v126 = vld [vmem:[#allocation5 + $0x3c] sm:$0xf]
    %v191 = vunpack.c.l.b16 %v47
    %v192 = vunpack.c.l.b16 %v48
    %v193 = vunpack.c.l.b16 %v49
    %v194 = vunpack.c.l.b16 %v50
    %v195 = vunpack.c.l.b16 %v51
    %v196 = vunpack.c.l.b16 %v52
    %v197 = vunpack.c.l.b16 %v53
    %v198 = vunpack.c.l.b16 %v54
    %v199 = vunpack.c.l.b16 %v55
    %v200 = vunpack.c.l.b16 %v56
    %v201 = vunpack.c.l.b16 %v57
    %v202 = vunpack.c.l.b16 %v58
    %v203 = vunpack.c.l.b16 %v59
    %v204 = vunpack.c.l.b16 %v60
    %v205 = vunpack.c.l.b16 %v61
    %v206 = vunpack.c.l.b16 %v62
    %v207 = vunpack.c.l.b16 %v63
    %v208 = vunpack.c.l.b16 %v64
    %v209 = vunpack.c.l.b16 %v65
    %v210 = vunpack.c.l.b16 %v66
    %v211 = vunpack.c.l.b16 %v67
    %v212 = vunpack.c.l.b16 %v68
    %v213 = vunpack.c.l.b16 %v69
    %v214 = vunpack.c.l.b16 %v70
    %v215 = vunpack.c.l.b16 %v71
    %v216 = vunpack.c.l.b16 %v72
    %v217 = vunpack.c.l.b16 %v73
    %v218 = vunpack.c.l.b16 %v74
    %v219 = vunpack.c.l.b16 %v75
    %v220 = vunpack.c.l.b16 %v76
    %v221 = vunpack.c.l.b16 %v77
    %v222 = vunpack.c.l.b16 %v78
    %v223 = vunpack.c.l.b16 %v79
    %v224 = vunpack.c.l.b16 %v80
    %v225 = vunpack.c.l.b16 %v81
    %v226 = vunpack.c.l.b16 %v82
    %v227 = vunpack.c.l.b16 %v83
    %v228 = vunpack.c.l.b16 %v84
    %v229 = vunpack.c.l.b16 %v85
    %v230 = vunpack.c.l.b16 %v86
    %v231 = vunpack.c.l.b16 %v87
    %v232 = vunpack.c.l.b16 %v88
    %v233 = vunpack.c.l.b16 %v89
    %v234 = vunpack.c.l.b16 %v90
    %v235 = vunpack.c.l.b16 %v91
    %v236 = vunpack.c.l.b16 %v92
    %v237 = vunpack.c.l.b16 %v93
    %v238 = vunpack.c.l.b16 %v94
    %v239 = vunpack.c.l.b16 %v95
    %v240 = vunpack.c.l.b16 %v96
    %v241 = vunpack.c.l.b16 %v97
    %v242 = vunpack.c.l.b16 %v98
    %v243 = vunpack.c.l.b16 %v99
    %v244 = vunpack.c.l.b16 %v100
    %v245 = vunpack.c.l.b16 %v101
    %v246 = vunpack.c.l.b16 %v102
    %v247 = vunpack.c.l.b16 %v103
    %v248 = vunpack.c.l.b16 %v104
    %v249 = vunpack.c.l.b16 %v105
    %v250 = vunpack.c.l.b16 %v106
    %v251 = vunpack.c.l.b16 %v107
    %v252 = vunpack.c.l.b16 %v108
    %v253 = vunpack.c.l.b16 %v109
    %v254 = vunpack.c.l.b16 %v110
    %v255 = vpack.c.b16 %v192, %v191
    %v256 = vpack.c.b16 %v194, %v193
    %v257 = vpack.c.b16 %v196, %v195
    %v258 = vpack.c.b16 %v198, %v197
    %v259 = vpack.c.b16 %v200, %v199
    %v260 = vpack.c.b16 %v202, %v201
    %v261 = vpack.c.b16 %v204, %v203
    %v262 = vpack.c.b16 %v206, %v205
    %v263 = vpack.c.b16 %v208, %v207
    %v264 = vpack.c.b16 %v210, %v209
    %v265 = vpack.c.b16 %v212, %v211
    %v266 = vpack.c.b16 %v214, %v213
    %v267 = vpack.c.b16 %v216, %v215
    %v268 = vpack.c.b16 %v218, %v217
    %v269 = vpack.c.b16 %v220, %v219
    %v270 = vpack.c.b16 %v222, %v221
    %v271 = vpack.c.b16 %v224, %v223
    %v272 = vpack.c.b16 %v226, %v225
    %v273 = vpack.c.b16 %v228, %v227
    %v274 = vpack.c.b16 %v230, %v229
    %v275 = vpack.c.b16 %v232, %v231
    %v276 = vpack.c.b16 %v234, %v233
    %v277 = vpack.c.b16 %v236, %v235
    %v278 = vpack.c.b16 %v238, %v237
    %v279 = vpack.c.b16 %v240, %v239
    %v280 = vpack.c.b16 %v242, %v241
    %v281 = vpack.c.b16 %v244, %v243
    %v282 = vpack.c.b16 %v246, %v245
    %v283 = vpack.c.b16 %v248, %v247
    %v284 = vpack.c.b16 %v250, %v249
    %v285 = vpack.c.b16 %v252, %v251
    %v286 = vpack.c.b16 %v254, %v253
    %v335 = vunpack.c.l.b16 %v111
    %v336 = vunpack.c.l.b16 %v112
    %v337 = vunpack.c.l.b16 %v113
    %v338 = vunpack.c.l.b16 %v114
    %v339 = vunpack.c.l.b16 %v115
    %v340 = vunpack.c.l.b16 %v116
    %v341 = vunpack.c.l.b16 %v117
    %v342 = vunpack.c.l.b16 %v118
    %v343 = vunpack.c.l.b16 %v119
    %v344 = vunpack.c.l.b16 %v120
    %v345 = vunpack.c.l.b16 %v121
    %v346 = vunpack.c.l.b16 %v122
    %v347 = vunpack.c.l.b16 %v123
    %v348 = vunpack.c.l.b16 %v124
    %v349 = vunpack.c.l.b16 %v125
    %v350 = vunpack.c.l.b16 %v126
    %v351 = vpack.c.b16 %v336, %v335
    %v352 = vpack.c.b16 %v338, %v337
    %v353 = vpack.c.b16 %v340, %v339
    %v354 = vpack.c.b16 %v342, %v341
    %v355 = vpack.c.b16 %v344, %v343
    %v356 = vpack.c.b16 %v346, %v345
    %v357 = vpack.c.b16 %v348, %v347
    %v358 = vpack.c.b16 %v350, %v349
    %367 = vmatprep.subr.bf16.mxu0 0
    %368 = vmatpush1.bf16.msra.mxu0 %v351
    %369 = vmatprep.subr.bf16.mxu0 0
    %370 = vmatpush1.bf16.msra.mxu0 %v352
    %371 = vmatprep.subr.bf16.mxu0 0
    %372 = vmatpush1.bf16.msra.mxu0 %v353
    %373 = vmatprep.subr.bf16.mxu0 0
    %374 = vmatpush1.bf16.msra.mxu0 %v354
    %375 = vmatprep.subr.bf16.mxu0 0
    %376 = vmatpush1.bf16.msra.mxu0 %v355
    %377 = vmatprep.subr.bf16.mxu0 0
    %378 = vmatpush1.bf16.msra.mxu0 %v356
    %379 = vmatprep.subr.bf16.mxu0 0
    %380 = vmatpush1.bf16.msra.mxu0 %v357
    %381 = vmatprep.subr.bf16.mxu0 0
    %382 = vmatpush1.bf16.msra.mxu0 %v358
    %383 = vmatprep.subr.bf16.mxu0 0
    %384 = vmatpush1.bf16.msra.mxu0 0
    %385 = vmatprep.subr.bf16.mxu0 0
    %386 = vmatpush1.bf16.msra.mxu0 0
    %387 = vmatprep.subr.bf16.mxu0 0
    %388 = vmatpush1.bf16.msra.mxu0 0
    %389 = vmatprep.subr.bf16.mxu0 0
    %390 = vmatpush1.bf16.msra.mxu0 0
    %391 = vmatprep.subr.bf16.mxu0 0
    %392 = vmatpush1.bf16.msra.mxu0 0
    %393 = vmatprep.subr.bf16.mxu0 0
    %394 = vmatpush1.bf16.msra.mxu0 0
    %395 = vmatprep.subr.bf16.mxu0 0
    %396 = vmatpush1.bf16.msra.mxu0 0
    %397 = vmatprep.subr.bf16.mxu0 0
    %398 = vmatpush1.bf16.msra.mxu0 0
    %399 = vmatprep.mubr.bf16.mxu0 0
    %400 = vmatmul.mubr.bf16.gmra.mrb[0].mxu0 %v255
    %v401 = vpop.f32.mrb[0].mxu0
    %v402 = vadd.f32 0.0, %v401
    %v403 = vpop.f32.mrb[0].mxu0
    %v404 = vpop.f32.mrb[0].mxu0
    %v405 = vadd.f32 0.0, %v404
    %v406 = vpop.f32.mrb[0].mxu0
    %407 = vmatprep.mubr.bf16.mxu0 0
    %408 = vmatmul.mubr.bf16.gmra.mrb[0].mxu0 %v256
    %v409 = vpop.f32.mrb[0].mxu0
    %v410 = vadd.f32 0.0, %v409
    %v411 = vpop.f32.mrb[0].mxu0
    %v412 = vpop.f32.mrb[0].mxu0
    %v413 = vadd.f32 0.0, %v412
    %v414 = vpop.f32.mrb[0].mxu0
    %415 = vmatprep.mubr.bf16.mxu0 0
    %416 = vmatmul.mubr.bf16.gmra.mrb[0].mxu0 %v257
    %v417 = vpop.f32.mrb[0].mxu0
    %v418 = vadd.f32 0.0, %v417
    %v419 = vpop.f32.mrb[0].mxu0
    %v420 = vpop.f32.mrb[0].mxu0
    %v421 = vadd.f32 0.0, %v420
    %v422 = vpop.f32.mrb[0].mxu0
    %423 = vmatprep.mubr.bf16.mxu0 0
    %424 = vmatmul.mubr.bf16.gmra.mrb[0].mxu0 %v258
    %v425 = vpop.f32.mrb[0].mxu0
    %v426 = vadd.f32 0.0, %v425
    %v427 = vpop.f32.mrb[0].mxu0
    %v428 = vpop.f32.mrb[0].mxu0
    %v429 = vadd.f32 0.0, %v428
    %v430 = vpop.f32.mrb[0].mxu0
    %431 = vmatprep.mubr.bf16.mxu0 0
    %432 = vmatmul.mubr.bf16.gmra.mrb[0].mxu0 %v259
    %v433 = vpop.f32.mrb[0].mxu0
    %v434 = vadd.f32 0.0, %v433
    %v435 = vpop.f32.mrb[0].mxu0
    %v436 = vpop.f32.mrb[0].mxu0
    %v437 = vadd.f32 0.0, %v436
    %v438 = vpop.f32.mrb[0].mxu0
    %439 = vmatprep.mubr.bf16.mxu0 0
    %440 = vmatmul.mubr.bf16.gmra.mrb[0].mxu0 %v260
    %v441 = vpop.f32.mrb[0].mxu0
    %v442 = vadd.f32 0.0, %v441
    %v443 = vpop.f32.mrb[0].mxu0
    %v444 = vpop.f32.mrb[0].mxu0
    %v445 = vadd.f32 0.0, %v444
    %v446 = vpop.f32.mrb[0].mxu0
    %447 = vmatprep.mubr.bf16.mxu0 0
    %448 = vmatmul.mubr.bf16.gmra.mrb[0].mxu0 %v261
    %v449 = vpop.f32.mrb[0].mxu0
    %v450 = vadd.f32 0.0, %v449
    %v451 = vpop.f32.mrb[0].mxu0
    %v452 = vpop.f32.mrb[0].mxu0
    %v453 = vadd.f32 0.0, %v452
    %v454 = vpop.f32.mrb[0].mxu0
    %455 = vmatprep.mubr.bf16.mxu0 0
    %456 = vmatmul.mubr.bf16.gmra.mrb[0].mxu0 %v262
    %v457 = vpop.f32.mrb[0].mxu0
    %v458 = vadd.f32 0.0, %v457
    %v459 = vpop.f32.mrb[0].mxu0
    %v460 = vpop.f32.mrb[0].mxu0
    %v461 = vadd.f32 0.0, %v460
    %v462 = vpop.f32.mrb[0].mxu0
    %463 = vmatprep.mubr.bf16.mxu0 0
    %464 = vmatmul.mubr.bf16.gmra.mrb[0].mxu0 %v263
    %v465 = vpop.f32.mrb[0].mxu0
    %v466 = vadd.f32 0.0, %v465
    %v467 = vpop.f32.mrb[0].mxu0
    %v468 = vpop.f32.mrb[0].mxu0
    %v469 = vadd.f32 0.0, %v468
    %v470 = vpop.f32.mrb[0].mxu0
    %471 = vmatprep.mubr.bf16.mxu0 0
    %472 = vmatmul.mubr.bf16.gmra.mrb[0].mxu0 %v264
    %v473 = vpop.f32.mrb[0].mxu0
    %v474 = vadd.f32 0.0, %v473
    %v475 = vpop.f32.mrb[0].mxu0
    %v476 = vpop.f32.mrb[0].mxu0
    %v477 = vadd.f32 0.0, %v476
    %v478 = vpop.f32.mrb[0].mxu0
    %479 = vmatprep.mubr.bf16.mxu0 0
    %480 = vmatmul.mubr.bf16.gmra.mrb[0].mxu0 %v265
    %v481 = vpop.f32.mrb[0].mxu0
    %v482 = vadd.f32 0.0, %v481
    %v483 = vpop.f32.mrb[0].mxu0
    %v484 = vpop.f32.mrb[0].mxu0
    %v485 = vadd.f32 0.0, %v484
    %v486 = vpop.f32.mrb[0].mxu0
    %487 = vmatprep.mubr.bf16.mxu0 0
    %488 = vmatmul.mubr.bf16.gmra.mrb[0].mxu0 %v266
    %v489 = vpop.f32.mrb[0].mxu0
    %v490 = vadd.f32 0.0, %v489
    %v491 = vpop.f32.mrb[0].mxu0
    %v492 = vpop.f32.mrb[0].mxu0
    %v493 = vadd.f32 0.0, %v492
    %v494 = vpop.f32.mrb[0].mxu0
    %495 = vmatprep.mubr.bf16.mxu0 0
    %496 = vmatmul.mubr.bf16.gmra.mrb[0].mxu0 %v267
    %v497 = vpop.f32.mrb[0].mxu0
    %v498 = vadd.f32 0.0, %v497
    %v499 = vpop.f32.mrb[0].mxu0
    %v500 = vpop.f32.mrb[0].mxu0
    %v501 = vadd.f32 0.0, %v500
    %v502 = vpop.f32.mrb[0].mxu0
    %503 = vmatprep.mubr.bf16.mxu0 0
    %504 = vmatmul.mubr.bf16.gmra.mrb[0].mxu0 %v268
    %v505 = vpop.f32.mrb[0].mxu0
    %v506 = vadd.f32 0.0, %v505
    %v507 = vpop.f32.mrb[0].mxu0
    %v508 = vpop.f32.mrb[0].mxu0
    %v509 = vadd.f32 0.0, %v508
    %v510 = vpop.f32.mrb[0].mxu0
    %511 = vmatprep.mubr.bf16.mxu0 0
    %512 = vmatmul.mubr.bf16.gmra.mrb[0].mxu0 %v269
    %v513 = vpop.f32.mrb[0].mxu0
    %v514 = vadd.f32 0.0, %v513
    %v515 = vpop.f32.mrb[0].mxu0
    %v516 = vpop.f32.mrb[0].mxu0
    %v517 = vadd.f32 0.0, %v516
    %v518 = vpop.f32.mrb[0].mxu0
    %519 = vmatprep.mubr.bf16.mxu0 0
    %520 = vmatmul.mubr.bf16.gmra.mrb[0].mxu0 %v270
    %v521 = vpop.f32.mrb[0].mxu0
    %v522 = vadd.f32 0.0, %v521
    %v523 = vpop.f32.mrb[0].mxu0
    %v524 = vpop.f32.mrb[0].mxu0
    %v525 = vadd.f32 0.0, %v524
    %v526 = vpop.f32.mrb[0].mxu0
    %527 = vmatprep.mubr.bf16.mxu0 0
    %528 = vmatmul.mubr.bf16.gmra.mrb[0].mxu0 %v271
    %v529 = vpop.f32.mrb[0].mxu0
    %v530 = vadd.f32 0.0, %v529
    %v531 = vpop.f32.mrb[0].mxu0
    %v532 = vpop.f32.mrb[0].mxu0
    %v533 = vadd.f32 0.0, %v532
    %v534 = vpop.f32.mrb[0].mxu0
    %535 = vmatprep.mubr.bf16.mxu0 0
    %536 = vmatmul.mubr.bf16.gmra.mrb[0].mxu0 %v272
    %v537 = vpop.f32.mrb[0].mxu0
    %v538 = vadd.f32 0.0, %v537
    %v539 = vpop.f32.mrb[0].mxu0
    %v540 = vpop.f32.mrb[0].mxu0
    %v541 = vadd.f32 0.0, %v540
    %v542 = vpop.f32.mrb[0].mxu0
    %543 = vmatprep.mubr.bf16.mxu0 0
    %544 = vmatmul.mubr.bf16.gmra.mrb[0].mxu0 %v273
    %v545 = vpop.f32.mrb[0].mxu0
    %v546 = vadd.f32 0.0, %v545
    %v547 = vpop.f32.mrb[0].mxu0
    %v548 = vpop.f32.mrb[0].mxu0
    %v549 = vadd.f32 0.0, %v548
    %v550 = vpop.f32.mrb[0].mxu0
    %551 = vmatprep.mubr.bf16.mxu0 0
    %552 = vmatmul.mubr.bf16.gmra.mrb[0].mxu0 %v274
    %v553 = vpop.f32.mrb[0].mxu0
    %v554 = vadd.f32 0.0, %v553
    %v555 = vpop.f32.mrb[0].mxu0
    %v556 = vpop.f32.mrb[0].mxu0
    %v557 = vadd.f32 0.0, %v556
    %v558 = vpop.f32.mrb[0].mxu0
    %559 = vmatprep.mubr.bf16.mxu0 0
    %560 = vmatmul.mubr.bf16.gmra.mrb[0].mxu0 %v275
    %v561 = vpop.f32.mrb[0].mxu0
    %v562 = vadd.f32 0.0, %v561
    %v563 = vpop.f32.mrb[0].mxu0
    %v564 = vpop.f32.mrb[0].mxu0
    %v565 = vadd.f32 0.0, %v564
    %v566 = vpop.f32.mrb[0].mxu0
    %567 = vmatprep.mubr.bf16.mxu0 0
    %568 = vmatmul.mubr.bf16.gmra.mrb[0].mxu0 %v276
    %v569 = vpop.f32.mrb[0].mxu0
    %v570 = vadd.f32 0.0, %v569
    %v571 = vpop.f32.mrb[0].mxu0
    %v572 = vpop.f32.mrb[0].mxu0
    %v573 = vadd.f32 0.0, %v572
    %v574 = vpop.f32.mrb[0].mxu0
    %575 = vmatprep.mubr.bf16.mxu0 0
    %576 = vmatmul.mubr.bf16.gmra.mrb[0].mxu0 %v277
    %v577 = vpop.f32.mrb[0].mxu0
    %v578 = vadd.f32 0.0, %v577
    %v579 = vpop.f32.mrb[0].mxu0
    %v580 = vpop.f32.mrb[0].mxu0
    %v581 = vadd.f32 0.0, %v580
    %v582 = vpop.f32.mrb[0].mxu0
    %583 = vmatprep.mubr.bf16.mxu0 0
    %584 = vmatmul.mubr.bf16.gmra.mrb[0].mxu0 %v278
    %v585 = vpop.f32.mrb[0].mxu0
    %v586 = vadd.f32 0.0, %v585
    %v587 = vpop.f32.mrb[0].mxu0
    %v588 = vpop.f32.mrb[0].mxu0
    %v589 = vadd.f32 0.0, %v588
    %v590 = vpop.f32.mrb[0].mxu0
    %591 = vmatprep.mubr.bf16.mxu0 0
    %592 = vmatmul.mubr.bf16.gmra.mrb[0].mxu0 %v279
    %v593 = vpop.f32.mrb[0].mxu0
    %v594 = vadd.f32 0.0, %v593
    %v595 = vpop.f32.mrb[0].mxu0
    %v596 = vpop.f32.mrb[0].mxu0
    %v597 = vadd.f32 0.0, %v596
    %v598 = vpop.f32.mrb[0].mxu0
    %599 = vmatprep.mubr.bf16.mxu0 0
    %600 = vmatmul.mubr.bf16.gmra.mrb[0].mxu0 %v280
    %v601 = vpop.f32.mrb[0].mxu0
    %v602 = vadd.f32 0.0, %v601
    %v603 = vpop.f32.mrb[0].mxu0
    %v604 = vpop.f32.mrb[0].mxu0
    %v605 = vadd.f32 0.0, %v604
    %v606 = vpop.f32.mrb[0].mxu0
    %607 = vmatprep.mubr.bf16.mxu0 0
    %608 = vmatmul.mubr.bf16.gmra.mrb[0].mxu0 %v281
    %v609 = vpop.f32.mrb[0].mxu0
    %v610 = vadd.f32 0.0, %v609
    %v611 = vpop.f32.mrb[0].mxu0
    %v612 = vpop.f32.mrb[0].mxu0
    %v613 = vadd.f32 0.0, %v612
    %v614 = vpop.f32.mrb[0].mxu0
    %615 = vmatprep.mubr.bf16.mxu0 0
    %616 = vmatmul.mubr.bf16.gmra.mrb[0].mxu0 %v282
    %v617 = vpop.f32.mrb[0].mxu0
    %v618 = vadd.f32 0.0, %v617
    %v619 = vpop.f32.mrb[0].mxu0
    %v620 = vpop.f32.mrb[0].mxu0
    %v621 = vadd.f32 0.0, %v620
    %v622 = vpop.f32.mrb[0].mxu0
    %623 = vmatprep.mubr.bf16.mxu0 0
    %624 = vmatmul.mubr.bf16.gmra.mrb[0].mxu0 %v283
    %v625 = vpop.f32.mrb[0].mxu0
    %v626 = vadd.f32 0.0, %v625
    %v627 = vpop.f32.mrb[0].mxu0
    %v628 = vpop.f32.mrb[0].mxu0
    %v629 = vadd.f32 0.0, %v628
    %v630 = vpop.f32.mrb[0].mxu0
    %631 = vmatprep.mubr.bf16.mxu0 0
    %632 = vmatmul.mubr.bf16.gmra.mrb[0].mxu0 %v284
    %v633 = vpop.f32.mrb[0].mxu0
    %v634 = vadd.f32 0.0, %v633
    %v635 = vpop.f32.mrb[0].mxu0
    %v636 = vpop.f32.mrb[0].mxu0
    %v637 = vadd.f32 0.0, %v636
    %v638 = vpop.f32.mrb[0].mxu0
    %639 = vmatprep.mubr.bf16.mxu0 0
    %640 = vmatmul.mubr.bf16.gmra.mrb[0].mxu0 %v285
    %v641 = vpop.f32.mrb[0].mxu0
    %v642 = vadd.f32 0.0, %v641
    %v643 = vpop.f32.mrb[0].mxu0
    %v644 = vpop.f32.mrb[0].mxu0
    %v645 = vadd.f32 0.0, %v644
    %v646 = vpop.f32.mrb[0].mxu0
    %647 = vmatprep.mubr.bf16.mxu0 0
    %648 = vmatmul.mubr.bf16.gmra.mrb[0].mxu0 %v286
    %v649 = vpop.f32.mrb[0].mxu0
    %v650 = vadd.f32 0.0, %v649
    %v651 = vpop.f32.mrb[0].mxu0
    %v652 = vpop.f32.mrb[0].mxu0
    %v653 = vadd.f32 0.0, %v652
    %v654 = vpop.f32.mrb[0].mxu0
    %655 = vdwg.mxu0
    %v656 = vld [vmem:[%s2] sm:$0x1]
    %v658 = vlaneseq
    %v659 = vshrl.u32 %v658, 7
    %v660 = vsub.s32 0, %v659
    %v661 = vrot.slane %v656, %v660
    %v663 = vmul.f32 %v402, %v661
    %v664 = vmul.f32 %v405, %v661
    %v665 = vmul.f32 %v410, %v661
    %v666 = vmul.f32 %v413, %v661
    %v667 = vmul.f32 %v418, %v661
    %v668 = vmul.f32 %v421, %v661
    %v669 = vmul.f32 %v426, %v661
    %v670 = vmul.f32 %v429, %v661
    %v671 = vmul.f32 %v434, %v661
    %v672 = vmul.f32 %v437, %v661
    %v673 = vmul.f32 %v442, %v661
    %v674 = vmul.f32 %v445, %v661
    %v675 = vmul.f32 %v450, %v661
    %v676 = vmul.f32 %v453, %v661
    %v677 = vmul.f32 %v458, %v661
    %v678 = vmul.f32 %v461, %v661
    %v679 = vmul.f32 %v466, %v661
    %v680 = vmul.f32 %v469, %v661
    %v681 = vmul.f32 %v474, %v661
    %v682 = vmul.f32 %v477, %v661
    %v683 = vmul.f32 %v482, %v661
    %v684 = vmul.f32 %v485, %v661
    %v685 = vmul.f32 %v490, %v661
    %v686 = vmul.f32 %v493, %v661
    %v687 = vmul.f32 %v498, %v661
    %v688 = vmul.f32 %v501, %v661
    %v689 = vmul.f32 %v506, %v661
    %v690 = vmul.f32 %v509, %v661
    %v691 = vmul.f32 %v514, %v661
    %v692 = vmul.f32 %v517, %v661
    %v693 = vmul.f32 %v522, %v661
    %v694 = vmul.f32 %v525, %v661
    %v695 = vmul.f32 %v530, %v661
    %v696 = vmul.f32 %v533, %v661
    %v697 = vmul.f32 %v538, %v661
    %v698 = vmul.f32 %v541, %v661
    %v699 = vmul.f32 %v546, %v661
    %v700 = vmul.f32 %v549, %v661
    %v701 = vmul.f32 %v554, %v661
    %v702 = vmul.f32 %v557, %v661
    %v703 = vmul.f32 %v562, %v661
    %v704 = vmul.f32 %v565, %v661
    %v705 = vmul.f32 %v570, %v661
    %v706 = vmul.f32 %v573, %v661
    %v707 = vmul.f32 %v578, %v661
    %v708 = vmul.f32 %v581, %v661
    %v709 = vmul.f32 %v586, %v661
    %v710 = vmul.f32 %v589, %v661
    %v711 = vmul.f32 %v594, %v661
    %v712 = vmul.f32 %v597, %v661
    %v713 = vmul.f32 %v602, %v661
    %v714 = vmul.f32 %v605, %v661
    %v715 = vmul.f32 %v610, %v661
    %v716 = vmul.f32 %v613, %v661
    %v717 = vmul.f32 %v618, %v661
    %v718 = vmul.f32 %v621, %v661
    %v719 = vmul.f32 %v626, %v661
    %v720 = vmul.f32 %v629, %v661
    %v721 = vmul.f32 %v634, %v661
    %v722 = vmul.f32 %v637, %v661
    %v723 = vmul.f32 %v642, %v661
    %v724 = vmul.f32 %v645, %v661
    %v725 = vmul.f32 %v650, %v661
    %v726 = vmul.f32 %v653, %v661
    %v727 = vld [vmem:[%s3] sm:$0x1]
    %v729 = vlaneseq
    %v730 = vshrl.u32 %v729, 7
    %v731 = vsub.s32 0, %v730
    %v732 = vrot.slane %v727, %v731
    %v734 = vadd.f32 %v663, %v732
    %v735 = vadd.f32 %v664, %v732
    %v736 = vadd.f32 %v665, %v732
    %v737 = vadd.f32 %v666, %v732
    %v738 = vadd.f32 %v667, %v732
    %v739 = vadd.f32 %v668, %v732
    %v740 = vadd.f32 %v669, %v732
    %v741 = vadd.f32 %v670, %v732
    %v742 = vadd.f32 %v671, %v732
    %v743 = vadd.f32 %v672, %v732
    %v744 = vadd.f32 %v673, %v732
    %v745 = vadd.f32 %v674, %v732
    %v746 = vadd.f32 %v675, %v732
    %v747 = vadd.f32 %v676, %v732
    %v748 = vadd.f32 %v677, %v732
    %v749 = vadd.f32 %v678, %v732
    %v750 = vadd.f32 %v679, %v732
    %v751 = vadd.f32 %v680, %v732
    %v752 = vadd.f32 %v681, %v732
    %v753 = vadd.f32 %v682, %v732
    %v754 = vadd.f32 %v683, %v732
    %v755 = vadd.f32 %v684, %v732
    %v756 = vadd.f32 %v685, %v732
    %v757 = vadd.f32 %v686, %v732
    %v758 = vadd.f32 %v687, %v732
    %v759 = vadd.f32 %v688, %v732
    %v760 = vadd.f32 %v689, %v732
    %v761 = vadd.f32 %v690, %v732
    %v762 = vadd.f32 %v691, %v732
    %v763 = vadd.f32 %v692, %v732
    %v764 = vadd.f32 %v693, %v732
    %v765 = vadd.f32 %v694, %v732
    %v766 = vadd.f32 %v695, %v732
    %v767 = vadd.f32 %v696, %v732
    %v768 = vadd.f32 %v697, %v732
    %v769 = vadd.f32 %v698, %v732
    %v770 = vadd.f32 %v699, %v732
    %v771 = vadd.f32 %v700, %v732
    %v772 = vadd.f32 %v701, %v732
    %v773 = vadd.f32 %v702, %v732
    %v774 = vadd.f32 %v703, %v732
    %v775 = vadd.f32 %v704, %v732
    %v776 = vadd.f32 %v705, %v732
    %v777 = vadd.f32 %v706, %v732
    %v778 = vadd.f32 %v707, %v732
    %v779 = vadd.f32 %v708, %v732
    %v780 = vadd.f32 %v709, %v732
    %v781 = vadd.f32 %v710, %v732
    %v782 = vadd.f32 %v711, %v732
    %v783 = vadd.f32 %v712, %v732
    %v784 = vadd.f32 %v713, %v732
    %v785 = vadd.f32 %v714, %v732
    %v786 = vadd.f32 %v715, %v732
    %v787 = vadd.f32 %v716, %v732
    %v788 = vadd.f32 %v717, %v732
    %v789 = vadd.f32 %v718, %v732
    %v790 = vadd.f32 %v719, %v732
    %v791 = vadd.f32 %v720, %v732
    %v792 = vadd.f32 %v721, %v732
    %v793 = vadd.f32 %v722, %v732
    %v794 = vadd.f32 %v723, %v732
    %v795 = vadd.f32 %v724, %v732
    %v796 = vadd.f32 %v725, %v732
    %v797 = vadd.f32 %v726, %v732
    %vm798 = vcmp.gt.f32.partialorder %v734, 0.0
    %vm799 = vcmp.gt.f32.partialorder %v735, 0.0
    %vm800 = vcmp.gt.f32.partialorder %v736, 0.0
    %vm801 = vcmp.gt.f32.partialorder %v737, 0.0
    %vm802 = vcmp.gt.f32.partialorder %v738, 0.0
    %vm803 = vcmp.gt.f32.partialorder %v739, 0.0
    %vm804 = vcmp.gt.f32.partialorder %v740, 0.0
    %vm805 = vcmp.gt.f32.partialorder %v741, 0.0
    %vm806 = vcmp.gt.f32.partialorder %v742, 0.0
    %vm807 = vcmp.gt.f32.partialorder %v743, 0.0
    %vm808 = vcmp.gt.f32.partialorder %v744, 0.0
    %vm809 = vcmp.gt.f32.partialorder %v745, 0.0
    %vm810 = vcmp.gt.f32.partialorder %v746, 0.0
    %vm811 = vcmp.gt.f32.partialorder %v747, 0.0
    %vm812 = vcmp.gt.f32.partialorder %v748, 0.0
    %vm813 = vcmp.gt.f32.partialorder %v749, 0.0
    %vm814 = vcmp.gt.f32.partialorder %v750, 0.0
    %vm815 = vcmp.gt.f32.partialorder %v751, 0.0
    %vm816 = vcmp.gt.f32.partialorder %v752, 0.0
    %vm817 = vcmp.gt.f32.partialorder %v753, 0.0
    %vm818 = vcmp.gt.f32.partialorder %v754, 0.0
    %vm819 = vcmp.gt.f32.partialorder %v755, 0.0
    %vm820 = vcmp.gt.f32.partialorder %v756, 0.0
    %vm821 = vcmp.gt.f32.partialorder %v757, 0.0
    %vm822 = vcmp.gt.f32.partialorder %v758, 0.0
    %vm823 = vcmp.gt.f32.partialorder %v759, 0.0
    %vm824 = vcmp.gt.f32.partialorder %v760, 0.0
    %vm825 = vcmp.gt.f32.partialorder %v761, 0.0
    %vm826 = vcmp.gt.f32.partialorder %v762, 0.0
    %vm827 = vcmp.gt.f32.partialorder %v763, 0.0
    %vm828 = vcmp.gt.f32.partialorder %v764, 0.0
    %vm829 = vcmp.gt.f32.partialorder %v765, 0.0
    %vm830 = vcmp.gt.f32.partialorder %v766, 0.0
    %vm831 = vcmp.gt.f32.partialorder %v767, 0.0
    %vm832 = vcmp.gt.f32.partialorder %v768, 0.0
    %vm833 = vcmp.gt.f32.partialorder %v769, 0.0
    %vm834 = vcmp.gt.f32.partialorder %v770, 0.0
    %vm835 = vcmp.gt.f32.partialorder %v771, 0.0
    %vm836 = vcmp.gt.f32.partialorder %v772, 0.0
    %vm837 = vcmp.gt.f32.partialorder %v773, 0.0
    %vm838 = vcmp.gt.f32.partialorder %v774, 0.0
    %vm839 = vcmp.gt.f32.partialorder %v775, 0.0
    %vm840 = vcmp.gt.f32.partialorder %v776, 0.0
    %vm841 = vcmp.gt.f32.partialorder %v777, 0.0
    %vm842 = vcmp.gt.f32.partialorder %v778, 0.0
    %vm843 = vcmp.gt.f32.partialorder %v779, 0.0
    %vm844 = vcmp.gt.f32.partialorder %v780, 0.0
    %vm845 = vcmp.gt.f32.partialorder %v781, 0.0
    %vm846 = vcmp.gt.f32.partialorder %v782, 0.0
    %vm847 = vcmp.gt.f32.partialorder %v783, 0.0
    %vm848 = vcmp.gt.f32.partialorder %v784, 0.0
    %vm849 = vcmp.gt.f32.partialorder %v785, 0.0
    %vm850 = vcmp.gt.f32.partialorder %v786, 0.0
    %vm851 = vcmp.gt.f32.partialorder %v787, 0.0
    %vm852 = vcmp.gt.f32.partialorder %v788, 0.0
    %vm853 = vcmp.gt.f32.partialorder %v789, 0.0
    %vm854 = vcmp.gt.f32.partialorder %v790, 0.0
    %vm855 = vcmp.gt.f32.partialorder %v791, 0.0
    %vm856 = vcmp.gt.f32.partialorder %v792, 0.0
    %vm857 = vcmp.gt.f32.partialorder %v793, 0.0
    %vm858 = vcmp.gt.f32.partialorder %v794, 0.0
    %vm859 = vcmp.gt.f32.partialorder %v795, 0.0
    %vm860 = vcmp.gt.f32.partialorder %v796, 0.0
    %vm861 = vcmp.gt.f32.partialorder %v797, 0.0
    %v862 = vmul.f32 %v734, 0.1
    %v863 = vmul.f32 %v735, 0.1
    %v864 = vmul.f32 %v736, 0.1
    %v865 = vmul.f32 %v737, 0.1
    %v866 = vmul.f32 %v738, 0.1
    %v867 = vmul.f32 %v739, 0.1
    %v868 = vmul.f32 %v740, 0.1
    %v869 = vmul.f32 %v741, 0.1
    %v870 = vmul.f32 %v742, 0.1
    %v871 = vmul.f32 %v743, 0.1
    %v872 = vmul.f32 %v744, 0.1
    %v873 = vmul.f32 %v745, 0.1
    %v874 = vmul.f32 %v746, 0.1
    %v875 = vmul.f32 %v747, 0.1
    %v876 = vmul.f32 %v748, 0.1
    %v877 = vmul.f32 %v749, 0.1
    %v878 = vmul.f32 %v750, 0.1
    %v879 = vmul.f32 %v751, 0.1
    %v880 = vmul.f32 %v752, 0.1
    %v881 = vmul.f32 %v753, 0.1
    %v882 = vmul.f32 %v754, 0.1
    %v883 = vmul.f32 %v755, 0.1
    %v884 = vmul.f32 %v756, 0.1
    %v885 = vmul.f32 %v757, 0.1
    %v886 = vmul.f32 %v758, 0.1
    %v887 = vmul.f32 %v759, 0.1
    %v888 = vmul.f32 %v760, 0.1
    %v889 = vmul.f32 %v761, 0.1
    %v890 = vmul.f32 %v762, 0.1
    %v891 = vmul.f32 %v763, 0.1
    %v892 = vmul.f32 %v764, 0.1
    %v893 = vmul.f32 %v765, 0.1
    %v894 = vmul.f32 %v766, 0.1
    %v895 = vmul.f32 %v767, 0.1
    %v896 = vmul.f32 %v768, 0.1
    %v897 = vmul.f32 %v769, 0.1
    %v898 = vmul.f32 %v770, 0.1
    %v899 = vmul.f32 %v771, 0.1
    %v900 = vmul.f32 %v772, 0.1
    %v901 = vmul.f32 %v773, 0.1
    %v902 = vmul.f32 %v774, 0.1
    %v903 = vmul.f32 %v775, 0.1
    %v904 = vmul.f32 %v776, 0.1
    %v905 = vmul.f32 %v777, 0.1
    %v906 = vmul.f32 %v778, 0.1
    %v907 = vmul.f32 %v779, 0.1
    %v908 = vmul.f32 %v780, 0.1
    %v909 = vmul.f32 %v781, 0.1
    %v910 = vmul.f32 %v782, 0.1
    %v911 = vmul.f32 %v783, 0.1
    %v912 = vmul.f32 %v784, 0.1
    %v913 = vmul.f32 %v785, 0.1
    %v914 = vmul.f32 %v786, 0.1
    %v915 = vmul.f32 %v787, 0.1
    %v916 = vmul.f32 %v788, 0.1
    %v917 = vmul.f32 %v789, 0.1
    %v918 = vmul.f32 %v790, 0.1
    %v919 = vmul.f32 %v791, 0.1
    %v920 = vmul.f32 %v792, 0.1
    %v921 = vmul.f32 %v793, 0.1
    %v922 = vmul.f32 %v794, 0.1
    %v923 = vmul.f32 %v795, 0.1
    %v924 = vmul.f32 %v796, 0.1
    %v925 = vmul.f32 %v797, 0.1
    %v926 = vsel %vm798, %v734, %v862
    %v927 = vsel %vm799, %v735, %v863
    %v928 = vsel %vm800, %v736, %v864
    %v929 = vsel %vm801, %v737, %v865
    %v930 = vsel %vm802, %v738, %v866
    %v931 = vsel %vm803, %v739, %v867
    %v932 = vsel %vm804, %v740, %v868
    %v933 = vsel %vm805, %v741, %v869
    %v934 = vsel %vm806, %v742, %v870
    %v935 = vsel %vm807, %v743, %v871
    %v936 = vsel %vm808, %v744, %v872
    %v937 = vsel %vm809, %v745, %v873
    %v938 = vsel %vm810, %v746, %v874
    %v939 = vsel %vm811, %v747, %v875
    %v940 = vsel %vm812, %v748, %v876
    %v941 = vsel %vm813, %v749, %v877
    %v942 = vsel %vm814, %v750, %v878
    %v943 = vsel %vm815, %v751, %v879
    %v944 = vsel %vm816, %v752, %v880
    %v945 = vsel %vm817, %v753, %v881
    %v946 = vsel %vm818, %v754, %v882
    %v947 = vsel %vm819, %v755, %v883
    %v948 = vsel %vm820, %v756, %v884
    %v949 = vsel %vm821, %v757, %v885
    %v950 = vsel %vm822, %v758, %v886
    %v951 = vsel %vm823, %v759, %v887
    %v952 = vsel %vm824, %v760, %v888
    %v953 = vsel %vm825, %v761, %v889
    %v954 = vsel %vm826, %v762, %v890
    %v955 = vsel %vm827, %v763, %v891
    %v956 = vsel %vm828, %v764, %v892
    %v957 = vsel %vm829, %v765, %v893
    %v958 = vsel %vm830, %v766, %v894
    %v959 = vsel %vm831, %v767, %v895
    %v960 = vsel %vm832, %v768, %v896
    %v961 = vsel %vm833, %v769, %v897
    %v962 = vsel %vm834, %v770, %v898
    %v963 = vsel %vm835, %v771, %v899
    %v964 = vsel %vm836, %v772, %v900
    %v965 = vsel %vm837, %v773, %v901
    %v966 = vsel %vm838, %v774, %v902
    %v967 = vsel %vm839, %v775, %v903
    %v968 = vsel %vm840, %v776, %v904
    %v969 = vsel %vm841, %v777, %v905
    %v970 = vsel %vm842, %v778, %v906
    %v971 = vsel %vm843, %v779, %v907
    %v972 = vsel %vm844, %v780, %v908
    %v973 = vsel %vm845, %v781, %v909
    %v974 = vsel %vm846, %v782, %v910
    %v975 = vsel %vm847, %v783, %v911
    %v976 = vsel %vm848, %v784, %v912
    %v977 = vsel %vm849, %v785, %v913
    %v978 = vsel %vm850, %v786, %v914
    %v979 = vsel %vm851, %v787, %v915
    %v980 = vsel %vm852, %v788, %v916
    %v981 = vsel %vm853, %v789, %v917
    %v982 = vsel %vm854, %v790, %v918
    %v983 = vsel %vm855, %v791, %v919
    %v984 = vsel %vm856, %v792, %v920
    %v985 = vsel %vm857, %v793, %v921
    %v986 = vsel %vm858, %v794, %v922
    %v987 = vsel %vm859, %v795, %v923
    %v988 = vsel %vm860, %v796, %v924
    %v989 = vsel %vm861, %v797, %v925
    %v990 = vpack.c.bf16 %v927, %v926
    %v991 = vpack.c.bf16 %v929, %v928
    %v992 = vpack.c.bf16 %v931, %v930
    %v993 = vpack.c.bf16 %v933, %v932
    %v994 = vpack.c.bf16 %v935, %v934
    %v995 = vpack.c.bf16 %v937, %v936
    %v996 = vpack.c.bf16 %v939, %v938
    %v997 = vpack.c.bf16 %v941, %v940
    %v998 = vpack.c.bf16 %v943, %v942
    %v999 = vpack.c.bf16 %v945, %v944
    %v1000 = vpack.c.bf16 %v947, %v946
    %v1001 = vpack.c.bf16 %v949, %v948
    %v1002 = vpack.c.bf16 %v951, %v950
    %v1003 = vpack.c.bf16 %v953, %v952
    %v1004 = vpack.c.bf16 %v955, %v954
    %v1005 = vpack.c.bf16 %v957, %v956
    %v1006 = vpack.c.bf16 %v959, %v958
    %v1007 = vpack.c.bf16 %v961, %v960
    %v1008 = vpack.c.bf16 %v963, %v962
    %v1009 = vpack.c.bf16 %v965, %v964
    %v1010 = vpack.c.bf16 %v967, %v966
    %v1011 = vpack.c.bf16 %v969, %v968
    %v1012 = vpack.c.bf16 %v971, %v970
    %v1013 = vpack.c.bf16 %v973, %v972
    %v1014 = vpack.c.bf16 %v975, %v974
    %v1015 = vpack.c.bf16 %v977, %v976
    %v1016 = vpack.c.bf16 %v979, %v978
    %v1017 = vpack.c.bf16 %v981, %v980
    %v1018 = vpack.c.bf16 %v983, %v982
    %v1019 = vpack.c.bf16 %v985, %v984
    %v1020 = vpack.c.bf16 %v987, %v986
    %v1021 = vpack.c.bf16 %v989, %v988
    %v1054 = vunpack.c.l.b16 %v990
    %v1055 = vunpack.c.h.b16 %v990
    %v1056 = vunpack.c.l.b16 %v991
    %v1057 = vunpack.c.h.b16 %v991
    %v1058 = vunpack.c.l.b16 %v992
    %v1059 = vunpack.c.h.b16 %v992
    %v1060 = vunpack.c.l.b16 %v993
    %v1061 = vunpack.c.h.b16 %v993
    %v1062 = vunpack.c.l.b16 %v994
    %v1063 = vunpack.c.h.b16 %v994
    %v1064 = vunpack.c.l.b16 %v995
    %v1065 = vunpack.c.h.b16 %v995
    %v1066 = vunpack.c.l.b16 %v996
    %v1067 = vunpack.c.h.b16 %v996
    %v1068 = vunpack.c.l.b16 %v997
    %v1069 = vunpack.c.h.b16 %v997
    %v1070 = vunpack.c.l.b16 %v998
    %v1071 = vunpack.c.h.b16 %v998
    %v1072 = vunpack.c.l.b16 %v999
    %v1073 = vunpack.c.h.b16 %v999
    %v1074 = vunpack.c.l.b16 %v1000
    %v1075 = vunpack.c.h.b16 %v1000
    %v1076 = vunpack.c.l.b16 %v1001
    %v1077 = vunpack.c.h.b16 %v1001
    %v1078 = vunpack.c.l.b16 %v1002
    %v1079 = vunpack.c.h.b16 %v1002
    %v1080 = vunpack.c.l.b16 %v1003
    %v1081 = vunpack.c.h.b16 %v1003
    %v1082 = vunpack.c.l.b16 %v1004
    %v1083 = vunpack.c.h.b16 %v1004
    %v1084 = vunpack.c.l.b16 %v1005
    %v1085 = vunpack.c.h.b16 %v1005
    %v1086 = vunpack.c.l.b16 %v1006
    %v1087 = vunpack.c.h.b16 %v1006
    %v1088 = vunpack.c.l.b16 %v1007
    %v1089 = vunpack.c.h.b16 %v1007
    %v1090 = vunpack.c.l.b16 %v1008
    %v1091 = vunpack.c.h.b16 %v1008
    %v1092 = vunpack.c.l.b16 %v1009
    %v1093 = vunpack.c.h.b16 %v1009
    %v1094 = vunpack.c.l.b16 %v1010
    %v1095 = vunpack.c.h.b16 %v1010
    %v1096 = vunpack.c.l.b16 %v1011
    %v1097 = vunpack.c.h.b16 %v1011
    %v1098 = vunpack.c.l.b16 %v1012
    %v1099 = vunpack.c.h.b16 %v1012
    %v1100 = vunpack.c.l.b16 %v1013
    %v1101 = vunpack.c.h.b16 %v1013
    %v1102 = vunpack.c.l.b16 %v1014
    %v1103 = vunpack.c.h.b16 %v1014
    %v1104 = vunpack.c.l.b16 %v1015
    %v1105 = vunpack.c.h.b16 %v1015
    %v1106 = vunpack.c.l.b16 %v1016
    %v1107 = vunpack.c.h.b16 %v1016
    %v1108 = vunpack.c.l.b16 %v1017
    %v1109 = vunpack.c.h.b16 %v1017
    %v1110 = vunpack.c.l.b16 %v1018
    %v1111 = vunpack.c.h.b16 %v1018
    %v1112 = vunpack.c.l.b16 %v1019
    %v1113 = vunpack.c.h.b16 %v1019
    %v1114 = vunpack.c.l.b16 %v1020
    %v1115 = vunpack.c.h.b16 %v1020
    %v1116 = vunpack.c.l.b16 %v1021
    %v1117 = vunpack.c.h.b16 %v1021
    %v1118 = vpack.c.b16 %v1054, %v1054
    %v1119 = vpack.c.b16 %v1055, %v1055
    %v1120 = vpack.c.b16 %v1056, %v1056
    %v1121 = vpack.c.b16 %v1057, %v1057
    %v1122 = vpack.c.b16 %v1058, %v1058
    %v1123 = vpack.c.b16 %v1059, %v1059
    %v1124 = vpack.c.b16 %v1060, %v1060
    %v1125 = vpack.c.b16 %v1061, %v1061
    %v1126 = vpack.c.b16 %v1062, %v1062
    %v1127 = vpack.c.b16 %v1063, %v1063
    %v1128 = vpack.c.b16 %v1064, %v1064
    %v1129 = vpack.c.b16 %v1065, %v1065
    %v1130 = vpack.c.b16 %v1066, %v1066
    %v1131 = vpack.c.b16 %v1067, %v1067
    %v1132 = vpack.c.b16 %v1068, %v1068
    %v1133 = vpack.c.b16 %v1069, %v1069
    %v1134 = vpack.c.b16 %v1070, %v1070
    %v1135 = vpack.c.b16 %v1071, %v1071
    %v1136 = vpack.c.b16 %v1072, %v1072
    %v1137 = vpack.c.b16 %v1073, %v1073
    %v1138 = vpack.c.b16 %v1074, %v1074
    %v1139 = vpack.c.b16 %v1075, %v1075
    %v1140 = vpack.c.b16 %v1076, %v1076
    %v1141 = vpack.c.b16 %v1077, %v1077
    %v1142 = vpack.c.b16 %v1078, %v1078
    %v1143 = vpack.c.b16 %v1079, %v1079
    %v1144 = vpack.c.b16 %v1080, %v1080
    %v1145 = vpack.c.b16 %v1081, %v1081
    %v1146 = vpack.c.b16 %v1082, %v1082
    %v1147 = vpack.c.b16 %v1083, %v1083
    %v1148 = vpack.c.b16 %v1084, %v1084
    %v1149 = vpack.c.b16 %v1085, %v1085
    %v1150 = vpack.c.b16 %v1086, %v1086
    %v1151 = vpack.c.b16 %v1087, %v1087
    %v1152 = vpack.c.b16 %v1088, %v1088
    %v1153 = vpack.c.b16 %v1089, %v1089
    %v1154 = vpack.c.b16 %v1090, %v1090
    %v1155 = vpack.c.b16 %v1091, %v1091
    %v1156 = vpack.c.b16 %v1092, %v1092
    %v1157 = vpack.c.b16 %v1093, %v1093
    %v1158 = vpack.c.b16 %v1094, %v1094
    %v1159 = vpack.c.b16 %v1095, %v1095
    %v1160 = vpack.c.b16 %v1096, %v1096
    %v1161 = vpack.c.b16 %v1097, %v1097
    %v1162 = vpack.c.b16 %v1098, %v1098
    %v1163 = vpack.c.b16 %v1099, %v1099
    %v1164 = vpack.c.b16 %v1100, %v1100
    %v1165 = vpack.c.b16 %v1101, %v1101
    %v1166 = vpack.c.b16 %v1102, %v1102
    %v1167 = vpack.c.b16 %v1103, %v1103
    %v1168 = vpack.c.b16 %v1104, %v1104
    %v1169 = vpack.c.b16 %v1105, %v1105
    %v1170 = vpack.c.b16 %v1106, %v1106
    %v1171 = vpack.c.b16 %v1107, %v1107
    %v1172 = vpack.c.b16 %v1108, %v1108
    %v1173 = vpack.c.b16 %v1109, %v1109
    %v1174 = vpack.c.b16 %v1110, %v1110
    %v1175 = vpack.c.b16 %v1111, %v1111
    %v1176 = vpack.c.b16 %v1112, %v1112
    %v1177 = vpack.c.b16 %v1113, %v1113
    %v1178 = vpack.c.b16 %v1114, %v1114
    %v1179 = vpack.c.b16 %v1115, %v1115
    %v1180 = vpack.c.b16 %v1116, %v1116
    %v1181 = vpack.c.b16 %v1117, %v1117
    %1246 = vst [vmem:[#allocation7] sm:$0xf] %v1118
    %1247 = vst [vmem:[#allocation7 + $0x4] sm:$0xf] %v1119
    %1248 = vst [vmem:[#allocation7 + $0x8] sm:$0xf] %v1120
    %1249 = vst [vmem:[#allocation7 + $0xc] sm:$0xf] %v1121
    %1250 = vst [vmem:[#allocation7 + $0x10] sm:$0xf] %v1122
    %1251 = vst [vmem:[#allocation7 + $0x14] sm:$0xf] %v1123
    %1252 = vst [vmem:[#allocation7 + $0x18] sm:$0xf] %v1124
    %1253 = vst [vmem:[#allocation7 + $0x1c] sm:$0xf] %v1125
    %1254 = vst [vmem:[#allocation7 + $0x20] sm:$0xf] %v1126
    %1255 = vst [vmem:[#allocation7 + $0x24] sm:$0xf] %v1127
    %1256 = vst [vmem:[#allocation7 + $0x28] sm:$0xf] %v1128
    %1257 = vst [vmem:[#allocation7 + $0x2c] sm:$0xf] %v1129
    %1258 = vst [vmem:[#allocation7 + $0x30] sm:$0xf] %v1130
    %1259 = vst [vmem:[#allocation7 + $0x34] sm:$0xf] %v1131
    %1260 = vst [vmem:[#allocation7 + $0x38] sm:$0xf] %v1132
    %1261 = vst [vmem:[#allocation7 + $0x3c] sm:$0xf] %v1133
    %1262 = vst [vmem:[#allocation7 + $0x40] sm:$0xf] %v1134
    %1263 = vst [vmem:[#allocation7 + $0x44] sm:$0xf] %v1135
    %1264 = vst [vmem:[#allocation7 + $0x48] sm:$0xf] %v1136
    %1265 = vst [vmem:[#allocation7 + $0x4c] sm:$0xf] %v1137
    %1266 = vst [vmem:[#allocation7 + $0x50] sm:$0xf] %v1138
    %1267 = vst [vmem:[#allocation7 + $0x54] sm:$0xf] %v1139
    %1268 = vst [vmem:[#allocation7 + $0x58] sm:$0xf] %v1140
    %1269 = vst [vmem:[#allocation7 + $0x5c] sm:$0xf] %v1141
    %1270 = vst [vmem:[#allocation7 + $0x60] sm:$0xf] %v1142
    %1271 = vst [vmem:[#allocation7 + $0x64] sm:$0xf] %v1143
    %1272 = vst [vmem:[#allocation7 + $0x68] sm:$0xf] %v1144
    %1273 = vst [vmem:[#allocation7 + $0x6c] sm:$0xf] %v1145
    %1274 = vst [vmem:[#allocation7 + $0x70] sm:$0xf] %v1146
    %1275 = vst [vmem:[#allocation7 + $0x74] sm:$0xf] %v1147
    %1276 = vst [vmem:[#allocation7 + $0x78] sm:$0xf] %v1148
    %1277 = vst [vmem:[#allocation7 + $0x7c] sm:$0xf] %v1149
    %1278 = vst [vmem:[#allocation7 + $0x80] sm:$0xf] %v1150
    %1279 = vst [vmem:[#allocation7 + $0x84] sm:$0xf] %v1151
    %1280 = vst [vmem:[#allocation7 + $0x88] sm:$0xf] %v1152
    %1281 = vst [vmem:[#allocation7 + $0x8c] sm:$0xf] %v1153
    %1282 = vst [vmem:[#allocation7 + $0x90] sm:$0xf] %v1154
    %1283 = vst [vmem:[#allocation7 + $0x94] sm:$0xf] %v1155
    %1284 = vst [vmem:[#allocation7 + $0x98] sm:$0xf] %v1156
    %1285 = vst [vmem:[#allocation7 + $0x9c] sm:$0xf] %v1157
    %1286 = vst [vmem:[#allocation7 + $0xa0] sm:$0xf] %v1158
    %1287 = vst [vmem:[#allocation7 + $0xa4] sm:$0xf] %v1159
    %1288 = vst [vmem:[#allocation7 + $0xa8] sm:$0xf] %v1160
    %1289 = vst [vmem:[#allocation7 + $0xac] sm:$0xf] %v1161
    %1290 = vst [vmem:[#allocation7 + $0xb0] sm:$0xf] %v1162
    %1291 = vst [vmem:[#allocation7 + $0xb4] sm:$0xf] %v1163
    %1292 = vst [vmem:[#allocation7 + $0xb8] sm:$0xf] %v1164
    %1293 = vst [vmem:[#allocation7 + $0xbc] sm:$0xf] %v1165
    %1294 = vst [vmem:[#allocation7 + $0xc0] sm:$0xf] %v1166
    %1295 = vst [vmem:[#allocation7 + $0xc4] sm:$0xf] %v1167
    %1296 = vst [vmem:[#allocation7 + $0xc8] sm:$0xf] %v1168
    %1297 = vst [vmem:[#allocation7 + $0xcc] sm:$0xf] %v1169
    %1298 = vst [vmem:[#allocation7 + $0xd0] sm:$0xf] %v1170
    %1299 = vst [vmem:[#allocation7 + $0xd4] sm:$0xf] %v1171
    %1300 = vst [vmem:[#allocation7 + $0xd8] sm:$0xf] %v1172
    %1301 = vst [vmem:[#allocation7 + $0xdc] sm:$0xf] %v1173
    %1302 = vst [vmem:[#allocation7 + $0xe0] sm:$0xf] %v1174
    %1303 = vst [vmem:[#allocation7 + $0xe4] sm:$0xf] %v1175
    %1304 = vst [vmem:[#allocation7 + $0xe8] sm:$0xf] %v1176
    %1305 = vst [vmem:[#allocation7 + $0xec] sm:$0xf] %v1177
    %1306 = vst [vmem:[#allocation7 + $0xf0] sm:$0xf] %v1178
    %1307 = vst [vmem:[#allocation7 + $0xf4] sm:$0xf] %v1179
    %1308 = vst [vmem:[#allocation7 + $0xf8] sm:$0xf] %v1180
    %1309 = vst [vmem:[#allocation7 + $0xfc] sm:$0xf] %v1181
    // Predicated region
    $region26: #{tpu_custom_call.1} parent=1 // pred_check
      _
    $region27: #{tpu_custom_call.1} parent=1 // pred_check_branch
      %1311 = sbr.rel (0) target = $region29
    $region28: #{tpu_custom_call.1} parent=1 // pred_region
      %s1313 = ssub.s32 4096, 4096
      %1314 = vsyncadd [#allocation4], %s1313
      %s1315 = sshll.u32 [#allocation7], 4
      %s1316 = int_to_ptr.vmem [resolvable:$true] %s1315
      %1321 = dma.vmem_to_hbm [thread:$0]  %s1316, 4096, %s4, [#allocation4], 64, 64, 4
    $region29: #{tpu_custom_call.1} parent=1 // pred_fallthru
      _
    // Predicated region
    $region30: #{tpu_custom_call.1} parent=1 // pred_check
      _
    $region31: #{tpu_custom_call.1} parent=1 // pred_check_branch
      %1323 = sbr.rel (0) target = $region33
    $region32: #{tpu_custom_call.1} parent=1 // pred_region
      %1324 = dma.done [#allocation4], 4096
    $region33: #{tpu_custom_call.1} parent=1 // pred_fallthru
      _
    %1325 = vsyncpa [#allocation3], 1
    %1326 = vsyncpa [#allocation6], 1
    %1327 = vsyncpa [#allocation4], 1

</llo_original>
